<compile_context>
chip_gen: v7x
topology: tpu7x:2x2x1
jax: 0.10.0
libtpu: 0.0.40
codegen_flags: <defaults>
</compile_context>

<pallas_src>
import functools

import jax
import jax.numpy as jnp
from jax.experimental import pallas as pl
from jax.experimental.pallas import tpu as pltpu

EPS = 1e-5
NUM_LAYERS = 4
VMEM_LIMIT = 48 * 1024 * 1024   # safe under v7x's 64 MiB physical, roomy on v5e/v6e


def _valid_row_mask(i, block_n, n_valid):
    """[1, block_n] f32 mask of real (un-padded) node rows; doubles as the MXU
    reduction vector for the BatchNorm moment sums."""
    rows = i * block_n + jax.lax.broadcasted_iota(jnp.int32, (1, block_n), 1)
    return (rows < n_valid).astype(jnp.float32)


def _bn_scale_shift(s1, s2, gamma, beta, n):
    # One-pass moments folded into a single scale/shift.
    # TODO(synk): E[x^2]-E[x]^2 can cancel for large activation means; switch to
    # a two-pass form if that regime matters.
    mu = s1 / n
    var = s2 / n - mu * mu
    scale = gamma * jax.lax.rsqrt(var + EPS)
    shift = beta - mu * scale
    return scale, shift


# --------------------------------------------------------------------------- #
# Kernels (one node-tile per grid step; accumulators live across the grid)
# --------------------------------------------------------------------------- #
def input_kernel(x_ref, w_ref, b_ref, a_ref, s1_ref, s2_ref, *, n_valid, block_n):
    """Sweep 0: a0 = lin1_1(x); accumulate bn1_1 moments over valid rows."""
    i = pl.program_id(0)

    @pl.when(i == 0)
    def _():
        s1_ref[...] = jnp.zeros_like(s1_ref)
        s2_ref[...] = jnp.zeros_like(s2_ref)

    a = jnp.dot(x_ref[...].astype(jnp.bfloat16), w_ref[...],
                preferred_element_type=jnp.float32) + b_ref[...]
    a_ref[...] = a.astype(jnp.bfloat16)

    valid = _valid_row_mask(i, block_n, n_valid)
    # Moment sums on the MXU instead of XLU axis-0 reductions.
    s1_ref[...] += jnp.dot(valid, a, preferred_element_type=jnp.float32)
    s2_ref[...] += jnp.dot(valid, a * a, preferred_element_type=jnp.float32)


def block_kernel(a_ref, scale_ref, shift_ref, p_ref, w_ref, b_ref,
                 a_out_ref, s1_ref, s2_ref, pooled_ref, *, n_valid, block_n):
    """Sweeps 1-3: apply previous BN (scale/shift) + ReLU (+ lin1_2 on the head
    sweep), accumulate this layer's graph readout, run the next Linear-ReLU-
    Linear block, and accumulate the next BN layer's moments."""
    i = pl.program_id(0)

    @pl.when(i == 0)
    def _():
        s1_ref[...] = jnp.zeros_like(s1_ref)
        s2_ref[...] = jnp.zeros_like(s2_ref)
        pooled_ref[...] = jnp.zeros_like(pooled_ref)

    k = w_ref.shape[0]            # 3 for the head sweep (lin1_2 + nn1), else 2
    a = a_ref[...].astype(jnp.float32)
    h = jnp.maximum(a * scale_ref[...] + shift_ref[...], 0.0)      # relu(bn(a))
    if k == 3:                    # hidden_rep[0] = lin1_2(relu(bn1_1(a0)))
        h = jnp.dot(h.astype(jnp.bfloat16), w_ref[0],
                    preferred_element_type=jnp.float32) + b_ref[0]
    h_bf = h.astype(jnp.bfloat16)                 # cast once; reused below

    # global_mean_pool accumulation for this hidden layer (1/|g| applied later).
    pooled_ref[...] += jnp.dot(p_ref[...], h_bf,
                               preferred_element_type=jnp.float32)

    # nn_k: Linear -> ReLU -> Linear (bf16 operands, f32 accumulation).
    u = jnp.maximum(jnp.dot(h_bf, w_ref[k - 2],
                            preferred_element_type=jnp.float32) + b_ref[k - 2],
                    0.0)
    a_next = jnp.dot(u.astype(jnp.bfloat16), w_ref[k - 1],
                     preferred_element_type=jnp.float32) + b_ref[k - 1]
    a_out_ref[...] = a_next.astype(jnp.bfloat16)

    valid = _valid_row_mask(i, block_n, n_valid)
    s1_ref[...] += jnp.dot(valid, a_next, preferred_element_type=jnp.float32)
    s2_ref[...] += jnp.dot(valid, a_next * a_next,
                           preferred_element_type=jnp.float32)


def tail_kernel(a_ref, scale_ref, shift_ref, p_ref, pooled_prev_ref, invc_ref,
                w_cat_ref, w_last_ref, b_sum_ref, h_ref, gp_ref, pooled_ref):
    """Sweep 4: final BN+ReLU -> node embedding h; last layer's pooled
    accumulation; at the last tile apply the 4 prediction linears."""
    i = pl.program_id(0)

    @pl.when(i == 0)
    def _():
        pooled_ref[...] = jnp.zeros_like(pooled_ref)

    a = a_ref[...].astype(jnp.float32)
    h = jnp.maximum(a * scale_ref[...] + shift_ref[...], 0.0)
    h_ref[...] = h
    pooled_ref[...] += jnp.dot(p_ref[...], h.astype(jnp.bfloat16),
                               preferred_element_type=jnp.float32)

    @pl.when(i == pl.num_programs(0) - 1)
    def _():
        invc = invc_ref[...]
        gp = jnp.dot((pooled_prev_ref[...] * invc).astype(jnp.bfloat16),
                     w_cat_ref[...], preferred_element_type=jnp.float32)
        gp += jnp.dot((pooled_ref[...] * invc).astype(jnp.bfloat16),
                      w_last_ref[...], preferred_element_type=jnp.float32)
        gp_ref[...] = gp + b_sum_ref[...]
        # TODO(synk): F.dropout(p=0.5, training=True) on each prediction head is
        # stochastic; implemented as identity (eval-mode) to stay deterministic.


# --------------------------------------------------------------------------- #
# Host wrapper: padding, pooling operator, 5 tiled sweeps
# --------------------------------------------------------------------------- #
def mlp_embedding_forward(x, edge_index, batch, num_graphs, params, *, block_n=512):
    """edge_index accepted for parity with the PyTorch forward but unused."""
    del edge_index
    assert block_n % 128 == 0, "block_n must be a multiple of 128 (lane-dense P)"
    N, C = x.shape
    H = params["w_in"].shape[1]
    G = num_graphs
    num_tiles = (N + block_n - 1) // block_n
    n_pad = num_tiles * block_n

    # Pad nodes; padded rows get graph id G -> all-zero one-hot column, and their
    # BN-moment contribution is masked out inside the kernels.
    x_pad = jnp.pad(x, ((0, n_pad - N), (0, 0)))
    batch_pad = jnp.concatenate(
        [batch, jnp.full((n_pad - N,), G, dtype=batch.dtype)])
    p_mat = (batch_pad[None, :] == jnp.arange(G)[:, None]).astype(jnp.bfloat16)
    counts = jnp.bincount(batch, length=G).astype(jnp.float32)
    inv_counts = (1.0 / jnp.maximum(counts, 1.0))[:, None]            # [G, 1]

    w_in = params["w_in"].astype(jnp.bfloat16)
    b_in = params["b_in"]
    w_hid = params["w_stack"][:7].astype(jnp.bfloat16)   # lin1_2, nn1, nn2, nn3
    b_hid = params["b_stack"][:7]
    w_cat_prev = params["w_stack"][7:10].reshape(3 * H, H).astype(jnp.bfloat16)
    w_last = params["w_stack"][10].astype(jnp.bfloat16)
    b_sum = jnp.sum(params["b_stack"][7:], axis=0)                     # [1, H]
    gamma, beta = params["gamma"], params["beta"]

    cparams = pltpu.CompilerParams(
        # Node-tile axis carries BN-moment / pooled accumulators -> "arbitrary".
        dimension_semantics=("arbitrary",),
        vmem_limit_bytes=VMEM_LIMIT)

    rows = lambda d: pl.BlockSpec((block_n, d), lambda i: (i, 0))
    full = lambda shape: pl.BlockSpec(shape, lambda i: (0,) * len(shape))
    p_spec = pl.BlockSpec((G, block_n), lambda i: (0, i))
    f32 = jnp.float32

    # ---- sweep 0: a0 = lin1_1(x), bn1_1 moments ------------------------------
    a_prev, s1, s2 = pl.pallas_call(
        functools.partial(input_kernel, n_valid=N, block_n=block_n),
        grid=(num_tiles,),
        in_specs=[rows(C), full((C, H)), full((1, H))],
        out_specs=(rows(H), full((1, H)), full((1, H))),
        out_shape=(jax.ShapeDtypeStruct((n_pad, H), jnp.bfloat16),
                   jax.ShapeDtypeStruct((1, H), f32),
                   jax.ShapeDtypeStruct((1, H), f32)),
        compiler_params=cparams,
    )(x_pad, w_in, b_in)

    # ---- sweeps 1-3: apply BN_k, pool hidden_rep[k], run next MLP ------------
    pooled = []
    w_slices = [(0, 3), (3, 5), (5, 7)]        # lin1_2+nn1 | nn2 | nn3
    for blk, (lo, hi) in enumerate(w_slices):
        scale, shift = _bn_scale_shift(s1, s2, gamma[blk], beta[blk], float(N))
        a_prev, s1, s2, pooled_blk = pl.pallas_call(
            functools.partial(block_kernel, n_valid=N, block_n=block_n),
            grid=(num_tiles,),
            in_specs=[rows(H), full((1, H)), full((1, H)), p_spec,
                      full((hi - lo, H, H)), full((hi - lo, 1, H))],
            out_specs=(rows(H), full((1, H)), full((1, H)), full((G, H))),
            out_shape=(jax.ShapeDtypeStruct((n_pad, H), jnp.bfloat16),
                       jax.ShapeDtypeStruct((1, H), f32),
                       jax.ShapeDtypeStruct((1, H), f32),
                       jax.ShapeDtypeStruct((G, H), f32)),
            compiler_params=cparams,
        )(a_prev, scale, shift, p_mat, w_hid[lo:hi], b_hid[lo:hi])
        pooled.append(pooled_blk)

    # ---- sweep 4: final BN+ReLU -> h, last pooling, prediction linears -------
    scale, shift = _bn_scale_shift(s1, s2, gamma[3], beta[3], float(N))
    pooled_prev = jnp.concatenate(pooled, axis=1)                      # [G, 3H]
    h_pad, gp = pl.pallas_call(
        tail_kernel,
        grid=(num_tiles,),
        in_specs=[rows(H), full((1, H)), full((1, H)), p_spec,
                  full((G, 3 * H)), full((G, 1)),
                  full((3 * H, H)), full((H, H)), full((1, H))],
        out_specs=(rows(H), full((G, H))),
        out_shape=(jax.ShapeDtypeStruct((n_pad, H), f32),
                   jax.ShapeDtypeStruct((G, H), f32)),
        scratch_shapes=[pltpu.VMEM((G, H), f32)],
        compiler_params=cparams,
    )(a_prev, scale, shift, p_mat, pooled_prev, inv_counts,
      w_cat_prev, w_last, b_sum)

    return h_pad[:N], gp


# --------------------------------------------------------------------------- #
# Parameters and references
# --------------------------------------------------------------------------- #
def init_params(key, in_chnl, hid):
    ks = jax.random.split(key, 6)
    return dict(
        w_in=0.1 * jax.random.normal(ks[0], (in_chnl, hid), jnp.float32),
        b_in=0.1 * jax.random.normal(ks[1], (1, hid), jnp.float32),
        w_stack=0.1 * jax.random.normal(ks[2], (11, hid, hid), jnp.float32),
        b_stack=0.1 * jax.random.normal(ks[3], (11, 1, hid), jnp.float32),
        gamma=1.0 + 0.1 * jax.random.normal(ks[4], (4, 1, hid), jnp.float32),
        beta=0.1 * jax.random.normal(ks[5], (4, 1, hid), jnp.float32),
    )


def ref_forward_f32(x, batch, num_graphs, prm):
    """Pure-f32 JAX reference mirroring the PyTorch forward (training-mode
    BatchNorm statistics, dropout = identity)."""
    G = num_graphs
    counts = jnp.bincount(batch, length=G).astype(jnp.float32)
    P = ((batch[None, :] == jnp.arange(G)[:, None]).astype(jnp.float32)
         / jnp.maximum(counts, 1.0)[:, None])

    def lin(h, i):
        return h @ prm["w_stack"][i] + prm["b_stack"][i]

    def bn(h, i):
        mu = h.mean(0, keepdims=True)
        var = ((h - mu) ** 2).mean(0, keepdims=True)
        return (h - mu) / jnp.sqrt(var + EPS) * prm["gamma"][i] + prm["beta"][i]

    h = x @ prm["w_in"] + prm["b_in"]
    h = lin(jax.nn.relu(bn(h, 0)), 0)
    hidden = [h]
    for blk in range(3):
        h = lin(jax.nn.relu(lin(h, 1 + 2 * blk)), 2 + 2 * blk)
        h = jax.nn.relu(bn(h, 1 + blk))
        hidden.append(h)
    gp = 0.0
    for layer, hr in enumerate(hidden):
        gp = gp + (P @ hr) @ prm["w_stack"][7 + layer] + prm["b_stack"][7 + layer]
    return h, gp


def ref_forward_mirror(x, batch, num_graphs, prm):
    """JAX reference mirroring the kernel's exact precision policy (bf16 MXU
    operands / bf16 stored intermediates, f32 accumulation, f32 one-pass BN,
    per-layer pooled accumulation, split prediction matmul)."""
    G = num_graphs
    H = prm["w_in"].shape[1]
    N = x.shape[0]
    bf16, f32 = jnp.bfloat16, jnp.float32
    P = (batch[None, :] == jnp.arange(G)[:, None]).astype(bf16)
    counts = jnp.bincount(batch, length=G).astype(f32)
    invc = (1.0 / jnp.maximum(counts, 1.0))[:, None]
    w = prm["w_stack"].astype(bf16)
    b = prm["b_stack"]

    def lin(h, wi, bi):
        return jnp.dot(h.astype(bf16), wi, preferred_element_type=f32) + bi

    def moments_scale_shift(a, i):
        s1 = jnp.sum(a, axis=0, keepdims=True)
        s2 = jnp.sum(a * a, axis=0, keepdims=True)
        return _bn_scale_shift(s1, s2, prm["gamma"][i], prm["beta"][i], float(N))

    a = jnp.dot(x.astype(bf16), prm["w_in"].astype(bf16),
                preferred_element_type=f32) + prm["b_in"]
    pooled = []
    h = a
    for blk in range(4):
        scale, shift = moments_scale_shift(a, blk)     # stats from f32 pre-cast
        a = a.astype(bf16).astype(f32)                 # stored/reloaded as bf16
        h = jnp.maximum(a * scale + shift, 0.0)
        if blk == 0:
            h = lin(h, w[0], b[0])                     # lin1_2
        pooled.append(jnp.dot(P, h.astype(bf16), preferred_element_type=f32))
        if blk < 3:
            lo = 1 + 2 * blk
            u = jnp.maximum(lin(h, w[lo], b[lo]), 0.0)
            a = lin(u, w[lo + 1], b[lo + 1])
    gp = jnp.dot((jnp.concatenate(pooled[:3], axis=1) * invc).astype(bf16),
                 prm["w_stack"][7:10].reshape(3 * H, H).astype(bf16),
                 preferred_element_type=f32)
    gp += jnp.dot((pooled[3] * invc).astype(bf16), w[10],
                  preferred_element_type=f32)
    gp += jnp.sum(prm["b_stack"][7:], axis=0)
    return h, gp


if __name__ == "__main__":
    key = jax.random.PRNGKey(0)
    k_x, k_p, k_x2 = jax.random.split(key, 3)

    # ---- Test 1: original tiny shapes (single node tile) --------------------
    N, C, Hd, G = 12, 4, 32, 2
    x = jax.random.normal(k_x, (N, C), jnp.float32)
    batch = jnp.array([0] * 6 + [1] * 6, dtype=jnp.int32)
    edge_index = jnp.zeros((2, 0), dtype=jnp.int32)   # unused (interface parity)
    params = init_params(k_p, C, Hd)

    h, gp = mlp_embedding_forward(x, edge_index, batch, G, params, block_n=128)
    jax.block_until_ready((h, gp))

    h_m, gp_m = ref_forward_mirror(x, batch, G, params)
    assert jnp.allclose(h, h_m, atol=2e-3, rtol=2e-3)
    assert jnp.allclose(gp, gp_m, atol=2e-3, rtol=2e-3)

    h_f, gp_f = ref_forward_f32(x, batch, G, params)
    assert jnp.allclose(h, h_f, atol=1e-1, rtol=1e-1)
    assert jnp.allclose(gp, gp_f, atol=1e-1, rtol=1e-1)

    # ---- Test 2: multi-tile path (3 tiles, masked BN stats, accumulators) ---
    N2, G2 = 300, 3
    x2 = jax.random.normal(k_x2, (N2, C), jnp.float32)
    batch2 = jnp.concatenate([jnp.full((100,), 0), jnp.full((120,), 1),
                              jnp.full((80,), 2)]).astype(jnp.int32)
    h2, gp2 = mlp_embedding_forward(x2, edge_index, batch2, G2, params,
                                    block_n=128)
    jax.block_until_ready((h2, gp2))

    h2_m, gp2_m = ref_forward_mirror(x2, batch2, G2, params)
    assert jnp.allclose(h2, h2_m, atol=2e-3, rtol=2e-3)
    assert jnp.allclose(gp2, gp2_m, atol=2e-3, rtol=2e-3)

    print("KERNEL_OK")
</pallas_src>

<mosaic_0001>
module attributes {stable_mosaic.version = 11 : i64} {
  func.func @input_kernel(%arg0: i32, %arg1: memref<128x4xf32, #tpu.memory_space<vmem>>, %arg2: memref<4x32xbf16, #tpu.memory_space<vmem>>, %arg3: memref<1x32xf32, #tpu.memory_space<vmem>>, %arg4: memref<128x32xbf16, #tpu.memory_space<vmem>>, %arg5: memref<1x32xf32, #tpu.memory_space<vmem>>, %arg6: memref<1x32xf32, #tpu.memory_space<vmem>>) attributes {dimension_semantics = [#tpu.dimension_semantics<arbitrary>], iteration_bounds = array<i64: 1>, scalar_prefetch = 0 : i64, scratch_operands = 0 : i64, tpu.core_type = #tpu.core_type<tc>, window_params = [{transform_indices = @transform_0, window_bounds = array<i64: 128, 4>}, {pipeline_mode = #tpu.pipeline_mode<synchronous>, transform_indices = @transform_1, window_bounds = array<i64: 4, 32>}, {pipeline_mode = #tpu.pipeline_mode<synchronous>, transform_indices = @transform_2, window_bounds = array<i64: 1, 32>}, {transform_indices = @transform_3, window_bounds = array<i64: 128, 32>}, {pipeline_mode = #tpu.pipeline_mode<synchronous>, transform_indices = @transform_4, window_bounds = array<i64: 1, 32>}, {pipeline_mode = #tpu.pipeline_mode<synchronous>, transform_indices = @transform_5, window_bounds = array<i64: 1, 32>}]} {
    %c0_i32 = arith.constant 0 : i32
    %0 = arith.cmpi eq, %arg0, %c0_i32 : i32
    %1 = arith.extui %0 : i1 to i32
    %c0_i32_0 = arith.constant 0 : i32
    %2 = arith.cmpi ne, %1, %c0_i32_0 : i32
    scf.if %2 {
      %cst_18 = arith.constant 0.000000e+00 : f32
      %29 = vector.broadcast %cst_18 : f32 to vector<1x32xf32>
      %c0_19 = arith.constant 0 : index
      %c0_20 = arith.constant 0 : index
      %30 = vector.load %arg5[%c0_19, %c0_20] : memref<1x32xf32, #tpu.memory_space<vmem>>, vector<1x32xf32>
      tpu.vector_store %arg5[%c0_19, %c0_20], %29 {strides = array<i32>} : memref<1x32xf32, #tpu.memory_space<vmem>>, vector<1x32xf32>,
      %cst_21 = arith.constant 0.000000e+00 : f32
      %31 = vector.broadcast %cst_21 : f32 to vector<1x32xf32>
      %c0_22 = arith.constant 0 : index
      %c0_23 = arith.constant 0 : index
      %32 = vector.load %arg6[%c0_22, %c0_23] : memref<1x32xf32, #tpu.memory_space<vmem>>, vector<1x32xf32>
      tpu.vector_store %arg6[%c0_22, %c0_23], %31 {strides = array<i32>} : memref<1x32xf32, #tpu.memory_space<vmem>>, vector<1x32xf32>,
    } else {
    }
    %c0 = arith.constant 0 : index
    %c0_1 = arith.constant 0 : index
    %3 = vector.load %arg1[%c0, %c0_1] : memref<128x4xf32, #tpu.memory_space<vmem>>, vector<128x4xf32>
    %4 = arith.truncf %3 : vector<128x4xf32> to vector<128x4xbf16>
    %c0_2 = arith.constant 0 : index
    %c0_3 = arith.constant 0 : index
    %5 = vector.load %arg2[%c0_2, %c0_3] : memref<4x32xbf16, #tpu.memory_space<vmem>>, vector<4x32xbf16>
    %cst = arith.constant dense<0.000000e+00> : vector<128x32xf32>
    %6 = tpu.matmul %4, %5, %cst {dimension_numbers = #tpu.dot_dimension_numbers<[1], [0], [0], [1], [0, 0, 1, 1], [], []>} : vector<128x4xbf16>, vector<4x32xbf16>, vector<128x32xf32> -> vector<128x32xf32>
    %c0_4 = arith.constant 0 : index
    %c0_5 = arith.constant 0 : index
    %7 = vector.load %arg3[%c0_4, %c0_5] : memref<1x32xf32, #tpu.memory_space<vmem>>, vector<1x32xf32>
    %8 = vector.broadcast %7 : vector<1x32xf32> to vector<128x32xf32>
    %9 = arith.addf %6, %8 : vector<128x32xf32>
    %10 = arith.truncf %9 : vector<128x32xf32> to vector<128x32xbf16>
    %c0_6 = arith.constant 0 : index
    %c0_7 = arith.constant 0 : index
    %11 = vector.load %arg4[%c0_6, %c0_7] : memref<128x32xbf16, #tpu.memory_space<vmem>>, vector<128x32xbf16>
    tpu.vector_store %arg4[%c0_6, %c0_7], %10 {strides = array<i32>} : memref<128x32xbf16, #tpu.memory_space<vmem>>, vector<128x32xbf16>,
    %c128_i32 = arith.constant 128 : i32
    %12 = arith.muli %arg0, %c128_i32 : i32
    %13 = tpu.iota {dimensions = array<i32: 1>} : vector<1x128xi32>
    %14 = vector.broadcast %12 : i32 to vector<1x128xi32>
    %15 = arith.addi %14, %13 : vector<1x128xi32>
    %c12_i32 = arith.constant 12 : i32
    %16 = vector.broadcast %c12_i32 : i32 to vector<1x128xi32>
    %17 = arith.cmpi slt, %15, %16 : vector<1x128xi32>
    %18 = arith.extui %17 : vector<1x128xi1> to vector<1x128xi32>
    %19 = arith.sitofp %18 : vector<1x128xi32> to vector<1x128xf32>
    %c0_8 = arith.constant 0 : index
    %c0_9 = arith.constant 0 : index
    %20 = vector.load %arg5[%c0_8, %c0_9] : memref<1x32xf32, #tpu.memory_space<vmem>>, vector<1x32xf32>
    %cst_10 = arith.constant dense<0.000000e+00> : vector<1x32xf32>
    %21 = tpu.matmul %19, %9, %cst_10 {dimension_numbers = #tpu.dot_dimension_numbers<[1], [0], [0], [1], [0, 0, 1, 1], [], []>} : vector<1x128xf32>, vector<128x32xf32>, vector<1x32xf32> -> vector<1x32xf32>
    %22 = arith.addf %20, %21 : vector<1x32xf32>
    %c0_11 = arith.constant 0 : index
    %c0_12 = arith.constant 0 : index
    %23 = vector.load %arg5[%c0_11, %c0_12] : memref<1x32xf32, #tpu.memory_space<vmem>>, vector<1x32xf32>
    tpu.vector_store %arg5[%c0_11, %c0_12], %22 {strides = array<i32>} : memref<1x32xf32, #tpu.memory_space<vmem>>, vector<1x32xf32>,
    %c0_13 = arith.constant 0 : index
    %c0_14 = arith.constant 0 : index
    %24 = vector.load %arg6[%c0_13, %c0_14] : memref<1x32xf32, #tpu.memory_space<vmem>>, vector<1x32xf32>
    %25 = arith.mulf %9, %9 : vector<128x32xf32>
    %cst_15 = arith.constant dense<0.000000e+00> : vector<1x32xf32>
    %26 = tpu.matmul %19, %25, %cst_15 {dimension_numbers = #tpu.dot_dimension_numbers<[1], [0], [0], [1], [0, 0, 1, 1], [], []>} : vector<1x128xf32>, vector<128x32xf32>, vector<1x32xf32> -> vector<1x32xf32>
    %27 = arith.addf %24, %26 : vector<1x32xf32>
    %c0_16 = arith.constant 0 : index
    %c0_17 = arith.constant 0 : index
    %28 = vector.load %arg6[%c0_16, %c0_17] : memref<1x32xf32, #tpu.memory_space<vmem>>, vector<1x32xf32>
    tpu.vector_store %arg6[%c0_16, %c0_17], %27 {strides = array<i32>} : memref<1x32xf32, #tpu.memory_space<vmem>>, vector<1x32xf32>,
    return
  }
  func.func @transform_0(%arg0: i32) -> (i32, i32) {
    %c0_i32 = arith.constant 0 : i32
    %c0_i32_0 = arith.constant 0 : i32
    return %arg0, %c0_i32 : i32, i32
  }
  func.func @transform_1(%arg0: i32) -> (i32, i32) {
    %c0_i32 = arith.constant 0 : i32
    %c0_i32_0 = arith.constant 0 : i32
    %c0_i32_1 = arith.constant 0 : i32
    return %c0_i32, %c0_i32_0 : i32, i32
  }
  func.func @transform_2(%arg0: i32) -> (i32, i32) {
    %c0_i32 = arith.constant 0 : i32
    %c0_i32_0 = arith.constant 0 : i32
    %c0_i32_1 = arith.constant 0 : i32
    return %c0_i32, %c0_i32_0 : i32, i32
  }
  func.func @transform_3(%arg0: i32) -> (i32, i32) {
    %c0_i32 = arith.constant 0 : i32
    %c0_i32_0 = arith.constant 0 : i32
    return %arg0, %c0_i32 : i32, i32
  }
  func.func @transform_4(%arg0: i32) -> (i32, i32) {
    %c0_i32 = arith.constant 0 : i32
    %c0_i32_0 = arith.constant 0 : i32
    %c0_i32_1 = arith.constant 0 : i32
    return %c0_i32, %c0_i32_0 : i32, i32
  }
  func.func @transform_5(%arg0: i32) -> (i32, i32) {
    %c0_i32 = arith.constant 0 : i32
    %c0_i32_0 = arith.constant 0 : i32
    %c0_i32_1 = arith.constant 0 : i32
    return %c0_i32, %c0_i32_0 : i32, i32
  }
}

</mosaic_0001>

<llo_original>
// kernel: tpu_custom_call.1
$region0: #{tpu_custom_call.1}
  #allocation0 [shape = 'u32[]', space=smem, size = 0x4, offset = 0x4, fixed_abs, tag = 'smem constant byte address 0x4 - core index']
  #allocation1 [shape = 'u32[144,128]{1,0:T(1,128)}', space=vmem, size = 0x12000, scoped, tag = 'internal scratch']
  %s0 = inlined_call_operand.vmem [shape: f32[128,4], index: 0, kind: input, shape index: {}]
  %s1 = inlined_call_operand.vmem [shape: bf16[4,32], index: 1, kind: input, shape index: {}]
  %s2 = inlined_call_operand.vmem [shape: f32[1,32], index: 2, kind: input, shape index: {}]
  %s3 = inlined_call_operand.vmem [shape: bf16[128,32], index: 3, kind: output, shape index: {0}]
  %s4 = inlined_call_operand.hbm [shape: f32[1,32], index: 4, kind: output, shape index: {1}]
  %s5 = inlined_call_operand.hbm [shape: f32[1,32], index: 5, kind: output, shape index: {2}]
  %6 = xla_tuple %s3, %s4, %s5
  %s7 = sld [smem:[#allocation0]]
  $region42: #{tpu_custom_call.1} parent=0
    _
  %s9 = ssub.s32 1, %s7
  %s10 = scalar_select 0, %s9, %s7
  $region1: #{tpu_custom_call.1} parent=0
    #allocation2 [shape = 'u8[512]{0}', space=vmem, size = 0x400, scoped, tag = 'output window, operand 1, single buffered']
    #allocation3 [shape = 's32[1]{0}', space=sflag, size = 0x4, scoped, tag = 'scoped memory for tpu_custom_call.1']
    #allocation4 [shape = 'u8[512]{0}', space=vmem, size = 0x400, scoped, tag = 'output window, operand 2, single buffered']
    #allocation5 [shape = 's32[1]{0}', space=sflag, size = 0x4, scoped, tag = 'scoped memory for tpu_custom_call.1']
    %11 = vsyncpa [#allocation3], 0
    %12 = vsyncpa [#allocation5], 0
    // Predicated region
    $region2: #{tpu_custom_call.1} parent=1 // pred_check
      _
    $region3: #{tpu_custom_call.1} parent=1 // pred_check_branch
      %14 = sbr.rel (0) target = $region5
    $region4: #{tpu_custom_call.1} parent=1 // pred_region
      _
    $region5: #{tpu_custom_call.1} parent=1 // pred_fallthru
      _
    // Predicated region
    $region6: #{tpu_custom_call.1} parent=1 // pred_check
      _
    $region7: #{tpu_custom_call.1} parent=1 // pred_check_branch
      %16 = sbr.rel (0) target = $region9
    $region8: #{tpu_custom_call.1} parent=1 // pred_region
      _
    $region9: #{tpu_custom_call.1} parent=1 // pred_fallthru
      _
    // Predicated region
    $region10: #{tpu_custom_call.1} parent=1 // pred_check
      _
    $region11: #{tpu_custom_call.1} parent=1 // pred_check_branch
      %18 = sbr.rel (0) target = $region13
    $region12: #{tpu_custom_call.1} parent=1 // pred_region
      _
    $region13: #{tpu_custom_call.1} parent=1 // pred_fallthru
      _
    %p20 = scmp.eq.s32.totalorder 0, 0
    // Predicated region
    $region14: #{tpu_custom_call.1} parent=1 // pred_check
      %p21 = pneg %p20
    $region15: #{tpu_custom_call.1} parent=1 // pred_check_branch
      %23 = sbr.rel (%p21) target = $region17
    $region16: #{tpu_custom_call.1} parent=1 // pred_region
      %vm24 = vcmask 253952
      %25 = vst.msk [vmem:[#allocation2] sm:$0x1] %vm24, 0.0
      %26 = vst.msk [vmem:[#allocation4] sm:$0x1] %vm24, 0.0
    $region17: #{tpu_custom_call.1} parent=1 // pred_fallthru
      _
    %v27 = vld [vmem:[%s0] sm:$0xff]
    %v28 = vld [vmem:[%s0 + $0x8] sm:$0xff]
    %v29 = vld [vmem:[%s0 + $0x10] sm:$0xff]
    %v30 = vld [vmem:[%s0 + $0x18] sm:$0xff]
    %v31 = vld [vmem:[%s0 + $0x20] sm:$0xff]
    %v32 = vld [vmem:[%s0 + $0x28] sm:$0xff]
    %v33 = vld [vmem:[%s0 + $0x30] sm:$0xff]
    %v34 = vld [vmem:[%s0 + $0x38] sm:$0xff]
    %v35 = vld [vmem:[%s0 + $0x40] sm:$0xff]
    %v36 = vld [vmem:[%s0 + $0x48] sm:$0xff]
    %v37 = vld [vmem:[%s0 + $0x50] sm:$0xff]
    %v38 = vld [vmem:[%s0 + $0x58] sm:$0xff]
    %v39 = vld [vmem:[%s0 + $0x60] sm:$0xff]
    %v40 = vld [vmem:[%s0 + $0x68] sm:$0xff]
    %v41 = vld [vmem:[%s0 + $0x70] sm:$0xff]
    %v42 = vld [vmem:[%s0 + $0x78] sm:$0xff]
    %v43 = vpack.c.bf16 %v28, %v27
    %v44 = vpack.c.bf16 %v30, %v29
    %v45 = vpack.c.bf16 %v32, %v31
    %v46 = vpack.c.bf16 %v34, %v33
    %v47 = vpack.c.bf16 %v36, %v35
    %v48 = vpack.c.bf16 %v38, %v37
    %v49 = vpack.c.bf16 %v40, %v39
    %v50 = vpack.c.bf16 %v42, %v41
    %v51 = vld [vmem:[%s1] sm:$0x3]
    %v52 = vld [vmem:[%s2] sm:$0x1]
    %v54 = vlaneseq
    %v55 = vshrl.u32 %v54, 7
    %v56 = vsub.s32 0, %v55
    %v57 = vrot.slane %v52, %v56
    %vm59 = vcmask 31744
    %v61 = vsel %vm59, %v43, 0
    %v64 = vsel %vm59, %v44, 0
    %v67 = vsel %vm59, %v45, 0
    %v70 = vsel %vm59, %v46, 0
    %v73 = vsel %vm59, %v47, 0
    %v76 = vsel %vm59, %v48, 0
    %v79 = vsel %vm59, %v49, 0
    %v82 = vsel %vm59, %v50, 0
    %vm84 = vcmask 1041408
    %v86 = vsel %vm84, %v51, 0
    %88 = vmatprep.subr.bf16.mxu0 0
    %89 = vmatpush1.bf16.msra.mxu0 %v86
    %90 = vmatprep.subr.bf16.mxu0 0
    %91 = vmatpush1.bf16.msra.mxu0 0
    %92 = vmatprep.subr.bf16.mxu0 0
    %93 = vmatpush1.bf16.msra.mxu0 0
    %94 = vmatprep.subr.bf16.mxu0 0
    %95 = vmatpush1.bf16.msra.mxu0 0
    %96 = vmatprep.subr.bf16.mxu0 0
    %97 = vmatpush1.bf16.msra.mxu0 0
    %98 = vmatprep.subr.bf16.mxu0 0
    %99 = vmatpush1.bf16.msra.mxu0 0
    %100 = vmatprep.subr.bf16.mxu0 0
    %101 = vmatpush1.bf16.msra.mxu0 0
    %102 = vmatprep.subr.bf16.mxu0 0
    %103 = vmatpush1.bf16.msra.mxu0 0
    %104 = vmatprep.subr.bf16.mxu0 0
    %105 = vmatpush1.bf16.msra.mxu0 0
    %106 = vmatprep.subr.bf16.mxu0 0
    %107 = vmatpush1.bf16.msra.mxu0 0
    %108 = vmatprep.subr.bf16.mxu0 0
    %109 = vmatpush1.bf16.msra.mxu0 0
    %110 = vmatprep.subr.bf16.mxu0 0
    %111 = vmatpush1.bf16.msra.mxu0 0
    %112 = vmatprep.subr.bf16.mxu0 0
    %113 = vmatpush1.bf16.msra.mxu0 0
    %114 = vmatprep.subr.bf16.mxu0 0
    %115 = vmatpush1.bf16.msra.mxu0 0
    %116 = vmatprep.subr.bf16.mxu0 0
    %117 = vmatpush1.bf16.msra.mxu0 0
    %118 = vmatprep.subr.bf16.mxu0 0
    %119 = vmatpush1.bf16.msra.mxu0 0
    %120 = vmatprep.mubr.bf16.mxu0 0
    %121 = vmatmul.mubr.bf16.gmra.mrb[0].mxu0 %v61
    %v122 = vpop.f32.mrb[0].mxu0
    %v123 = vadd.f32 %v57, %v122
    %v124 = vpop.f32.mrb[0].mxu0
    %v125 = vpop.f32.mrb[0].mxu0
    %v126 = vadd.f32 %v57, %v125
    %v127 = vpop.f32.mrb[0].mxu0
    %128 = vmatprep.mubr.bf16.mxu0 0
    %129 = vmatmul.mubr.bf16.gmra.mrb[0].mxu0 %v64
    %v130 = vpop.f32.mrb[0].mxu0
    %v131 = vadd.f32 %v57, %v130
    %v132 = vpop.f32.mrb[0].mxu0
    %v133 = vpop.f32.mrb[0].mxu0
    %v134 = vadd.f32 %v57, %v133
    %v135 = vpop.f32.mrb[0].mxu0
    %136 = vmatprep.mubr.bf16.mxu0 0
    %137 = vmatmul.mubr.bf16.gmra.mrb[0].mxu0 %v67
    %v138 = vpop.f32.mrb[0].mxu0
    %v139 = vadd.f32 %v57, %v138
    %v140 = vpop.f32.mrb[0].mxu0
    %v141 = vpop.f32.mrb[0].mxu0
    %v142 = vadd.f32 %v57, %v141
    %v143 = vpop.f32.mrb[0].mxu0
    %144 = vmatprep.mubr.bf16.mxu0 0
    %145 = vmatmul.mubr.bf16.gmra.mrb[0].mxu0 %v70
    %v146 = vpop.f32.mrb[0].mxu0
    %v147 = vadd.f32 %v57, %v146
    %v148 = vpop.f32.mrb[0].mxu0
    %v149 = vpop.f32.mrb[0].mxu0
    %v150 = vadd.f32 %v57, %v149
    %v151 = vpop.f32.mrb[0].mxu0
    %152 = vmatprep.mubr.bf16.mxu0 0
    %153 = vmatmul.mubr.bf16.gmra.mrb[0].mxu0 %v73
    %v154 = vpop.f32.mrb[0].mxu0
    %v155 = vadd.f32 %v57, %v154
    %v156 = vpop.f32.mrb[0].mxu0
    %v157 = vpop.f32.mrb[0].mxu0
    %v158 = vadd.f32 %v57, %v157
    %v159 = vpop.f32.mrb[0].mxu0
    %160 = vmatprep.mubr.bf16.mxu0 0
    %161 = vmatmul.mubr.bf16.gmra.mrb[0].mxu0 %v76
    %v162 = vpop.f32.mrb[0].mxu0
    %v163 = vadd.f32 %v57, %v162
    %v164 = vpop.f32.mrb[0].mxu0
    %v165 = vpop.f32.mrb[0].mxu0
    %v166 = vadd.f32 %v57, %v165
    %v167 = vpop.f32.mrb[0].mxu0
    %168 = vmatprep.mubr.bf16.mxu0 0
    %169 = vmatmul.mubr.bf16.gmra.mrb[0].mxu0 %v79
    %v170 = vpop.f32.mrb[0].mxu0
    %v171 = vadd.f32 %v57, %v170
    %v172 = vpop.f32.mrb[0].mxu0
    %v173 = vpop.f32.mrb[0].mxu0
    %v174 = vadd.f32 %v57, %v173
    %v175 = vpop.f32.mrb[0].mxu0
    %176 = vmatprep.mubr.bf16.mxu0 0
    %177 = vmatmul.mubr.bf16.gmra.mrb[0].mxu0 %v82
    %v178 = vpop.f32.mrb[0].mxu0
    %v179 = vadd.f32 %v57, %v178
    %v180 = vpop.f32.mrb[0].mxu0
    %v181 = vpop.f32.mrb[0].mxu0
    %v182 = vadd.f32 %v57, %v181
    %v183 = vpop.f32.mrb[0].mxu0
    %184 = vdwg.mxu0
    %v185 = vpack.c.bf16 %v126, %v123
    %v186 = vpack.c.bf16 %v134, %v131
    %v187 = vpack.c.bf16 %v142, %v139
    %v188 = vpack.c.bf16 %v150, %v147
    %v189 = vpack.c.bf16 %v158, %v155
    %v190 = vpack.c.bf16 %v166, %v163
    %v191 = vpack.c.bf16 %v174, %v171
    %v192 = vpack.c.bf16 %v182, %v179
    %v201 = vunpack.c.l.b16 %v185
    %v202 = vunpack.c.h.b16 %v185
    %v203 = vunpack.c.l.b16 %v186
    %v204 = vunpack.c.h.b16 %v186
    %v205 = vunpack.c.l.b16 %v187
    %v206 = vunpack.c.h.b16 %v187
    %v207 = vunpack.c.l.b16 %v188
    %v208 = vunpack.c.h.b16 %v188
    %v209 = vunpack.c.l.b16 %v189
    %v210 = vunpack.c.h.b16 %v189
    %v211 = vunpack.c.l.b16 %v190
    %v212 = vunpack.c.h.b16 %v190
    %v213 = vunpack.c.l.b16 %v191
    %v214 = vunpack.c.h.b16 %v191
    %v215 = vunpack.c.l.b16 %v192
    %v216 = vunpack.c.h.b16 %v192
    %v217 = vpack.c.b16 %v201, %v201
    %v218 = vpack.c.b16 %v202, %v202
    %v219 = vpack.c.b16 %v203, %v203
    %v220 = vpack.c.b16 %v204, %v204
    %v221 = vpack.c.b16 %v205, %v205
    %v222 = vpack.c.b16 %v206, %v206
    %v223 = vpack.c.b16 %v207, %v207
    %v224 = vpack.c.b16 %v208, %v208
    %v225 = vpack.c.b16 %v209, %v209
    %v226 = vpack.c.b16 %v210, %v210
    %v227 = vpack.c.b16 %v211, %v211
    %v228 = vpack.c.b16 %v212, %v212
    %v229 = vpack.c.b16 %v213, %v213
    %v230 = vpack.c.b16 %v214, %v214
    %v231 = vpack.c.b16 %v215, %v215
    %v232 = vpack.c.b16 %v216, %v216
    %vm249 = vcmask 257024
    %250 = vst.msk [vmem:[%s3] sm:$0xf] %vm249, %v217
    %251 = vst.msk [vmem:[%s3 + $0x4] sm:$0xf] %vm249, %v218
    %252 = vst.msk [vmem:[%s3 + $0x8] sm:$0xf] %vm249, %v219
    %253 = vst.msk [vmem:[%s3 + $0xc] sm:$0xf] %vm249, %v220
    %254 = vst.msk [vmem:[%s3 + $0x10] sm:$0xf] %vm249, %v221
    %255 = vst.msk [vmem:[%s3 + $0x14] sm:$0xf] %vm249, %v222
    %256 = vst.msk [vmem:[%s3 + $0x18] sm:$0xf] %vm249, %v223
    %257 = vst.msk [vmem:[%s3 + $0x1c] sm:$0xf] %vm249, %v224
    %258 = vst.msk [vmem:[%s3 + $0x20] sm:$0xf] %vm249, %v225
    %259 = vst.msk [vmem:[%s3 + $0x24] sm:$0xf] %vm249, %v226
    %260 = vst.msk [vmem:[%s3 + $0x28] sm:$0xf] %vm249, %v227
    %261 = vst.msk [vmem:[%s3 + $0x2c] sm:$0xf] %vm249, %v228
    %262 = vst.msk [vmem:[%s3 + $0x30] sm:$0xf] %vm249, %v229
    %263 = vst.msk [vmem:[%s3 + $0x34] sm:$0xf] %vm249, %v230
    %264 = vst.msk [vmem:[%s3 + $0x38] sm:$0xf] %vm249, %v231
    %265 = vst.msk [vmem:[%s3 + $0x3c] sm:$0xf] %vm249, %v232
    %s266 = smul.u32 0, 128
    %v267 = vlaneseq
    %v268 = vand.u32 %v267, 127
    %v269 = vstv %s266
    %v270 = vadd.s32 %v269, %v268
    %vm271 = vcmp.lt.s32.totalorder %v270, 12
    %v272 = vsel %vm271, 1, 0
    %v273 = vcvt.s32.f32 %v272
    %v274 = vld [vmem:[#allocation2] sm:$0x1]
    %275 = vmatprep.subr.mxu0 0.0
    %276 = vmatpush1.msra.mxu0 %v123
    %277 = vmatprep.subr.mxu0 0.0
    %278 = vmatpush1.msra.mxu0 %v126
    %279 = vmatprep.subr.mxu0 0.0
    %280 = vmatpush1.msra.mxu0 %v131
    %281 = vmatprep.subr.mxu0 0.0
    %282 = vmatpush1.msra.mxu0 %v134
    %283 = vmatprep.subr.mxu0 0.0
    %284 = vmatpush1.msra.mxu0 %v139
    %285 = vmatprep.subr.mxu0 0.0
    %286 = vmatpush1.msra.mxu0 %v142
    %287 = vmatprep.subr.mxu0 0.0
    %288 = vmatpush1.msra.mxu0 %v147
    %289 = vmatprep.subr.mxu0 0.0
    %290 = vmatpush1.msra.mxu0 %v150
    %291 = vmatprep.subr.mxu0 0.0
    %292 = vmatpush1.msra.mxu0 %v155
    %293 = vmatprep.subr.mxu0 0.0
    %294 = vmatpush1.msra.mxu0 %v158
    %295 = vmatprep.subr.mxu0 0.0
    %296 = vmatpush1.msra.mxu0 %v163
    %297 = vmatprep.subr.mxu0 0.0
    %298 = vmatpush1.msra.mxu0 %v166
    %299 = vmatprep.subr.mxu0 0.0
    %300 = vmatpush1.msra.mxu0 %v171
    %301 = vmatprep.subr.mxu0 0.0
    %302 = vmatpush1.msra.mxu0 %v174
    %303 = vmatprep.subr.mxu0 0.0
    %304 = vmatpush1.msra.mxu0 %v179
    %305 = vmatprep.subr.mxu0 0.0
    %306 = vmatpush1.msra.mxu0 %v182
    %307 = vmatprep.subr.mxu0 0.0
    %308 = vmatpush1.msra.mxu0 0.0
    %309 = vmatprep.subr.mxu0 0.0
    %310 = vmatpush1.msra.mxu0 0.0
    %311 = vmatprep.subr.mxu0 0.0
    %312 = vmatpush1.msra.mxu0 0.0
    %313 = vmatprep.subr.mxu0 0.0
    %314 = vmatpush1.msra.mxu0 0.0
    %315 = vmatprep.subr.mxu0 0.0
    %316 = vmatpush1.msra.mxu0 0.0
    %317 = vmatprep.subr.mxu0 0.0
    %318 = vmatpush1.msra.mxu0 0.0
    %319 = vmatprep.subr.mxu0 0.0
    %320 = vmatpush1.msra.mxu0 0.0
    %321 = vmatprep.subr.mxu0 0.0
    %322 = vmatpush1.msra.mxu0 0.0
    %323 = vmatprep.subr.mxu0 0.0
    %324 = vmatpush1.msra.mxu0 0.0
    %325 = vmatprep.subr.mxu0 0.0
    %326 = vmatpush1.msra.mxu0 0.0
    %327 = vmatprep.subr.mxu0 0.0
    %328 = vmatpush1.msra.mxu0 0.0
    %329 = vmatprep.subr.mxu0 0.0
    %330 = vmatpush1.msra.mxu0 0.0
    %331 = vmatprep.subr.mxu0 0.0
    %332 = vmatpush1.msra.mxu0 0.0
    %333 = vmatprep.subr.mxu0 0.0
    %334 = vmatpush1.msra.mxu0 0.0
    %335 = vmatprep.subr.mxu0 0.0
    %336 = vmatpush1.msra.mxu0 0.0
    %337 = vmatprep.subr.mxu0 0.0
    %338 = vmatpush1.msra.mxu0 0.0
    %339 = vmatprep.mubr.f32.mxu0 0.0
    %340 = vmatmul.mubr.f32.gmra.mrb[0].mxu0 %v273
    %v341 = vpop.f32.mrb[0].mxu0
    %v342 = vadd.f32 0.0, %v341
    %v343 = vpop.f32.mrb[0].mxu0
    %344 = vdwg.mxu0
    %v345 = vadd.f32 %v274, %v342
    %vm346 = vcmask 253952
    %347 = vst.msk [vmem:[#allocation2] sm:$0x1] %vm346, %v345
    %v348 = vld [vmem:[#allocation4] sm:$0x1]
    %v349 = vmul.f32 %v123, %v123
    %v350 = vmul.f32 %v126, %v126
    %v351 = vmul.f32 %v131, %v131
    %v352 = vmul.f32 %v134, %v134
    %v353 = vmul.f32 %v139, %v139
    %v354 = vmul.f32 %v142, %v142
    %v355 = vmul.f32 %v147, %v147
    %v356 = vmul.f32 %v150, %v150
    %v357 = vmul.f32 %v155, %v155
    %v358 = vmul.f32 %v158, %v158
    %v359 = vmul.f32 %v163, %v163
    %v360 = vmul.f32 %v166, %v166
    %v361 = vmul.f32 %v171, %v171
    %v362 = vmul.f32 %v174, %v174
    %v363 = vmul.f32 %v179, %v179
    %v364 = vmul.f32 %v182, %v182
    %365 = vmatprep.subr.mxu0 0.0
    %366 = vmatpush1.msra.mxu0 %v349
    %367 = vmatprep.subr.mxu0 0.0
    %368 = vmatpush1.msra.mxu0 %v350
    %369 = vmatprep.subr.mxu0 0.0
    %370 = vmatpush1.msra.mxu0 %v351
    %371 = vmatprep.subr.mxu0 0.0
    %372 = vmatpush1.msra.mxu0 %v352
    %373 = vmatprep.subr.mxu0 0.0
    %374 = vmatpush1.msra.mxu0 %v353
    %375 = vmatprep.subr.mxu0 0.0
    %376 = vmatpush1.msra.mxu0 %v354
    %377 = vmatprep.subr.mxu0 0.0
    %378 = vmatpush1.msra.mxu0 %v355
    %379 = vmatprep.subr.mxu0 0.0
    %380 = vmatpush1.msra.mxu0 %v356
    %381 = vmatprep.subr.mxu0 0.0
    %382 = vmatpush1.msra.mxu0 %v357
    %383 = vmatprep.subr.mxu0 0.0
    %384 = vmatpush1.msra.mxu0 %v358
    %385 = vmatprep.subr.mxu0 0.0
    %386 = vmatpush1.msra.mxu0 %v359
    %387 = vmatprep.subr.mxu0 0.0
    %388 = vmatpush1.msra.mxu0 %v360
    %389 = vmatprep.subr.mxu0 0.0
    %390 = vmatpush1.msra.mxu0 %v361
    %391 = vmatprep.subr.mxu0 0.0
    %392 = vmatpush1.msra.mxu0 %v362
    %393 = vmatprep.subr.mxu0 0.0
    %394 = vmatpush1.msra.mxu0 %v363
    %395 = vmatprep.subr.mxu0 0.0
    %396 = vmatpush1.msra.mxu0 %v364
    %397 = vmatprep.subr.mxu0 0.0
    %398 = vmatpush1.msra.mxu0 0.0
    %399 = vmatprep.subr.mxu0 0.0
    %400 = vmatpush1.msra.mxu0 0.0
    %401 = vmatprep.subr.mxu0 0.0
    %402 = vmatpush1.msra.mxu0 0.0
    %403 = vmatprep.subr.mxu0 0.0
    %404 = vmatpush1.msra.mxu0 0.0
    %405 = vmatprep.subr.mxu0 0.0
    %406 = vmatpush1.msra.mxu0 0.0
    %407 = vmatprep.subr.mxu0 0.0
    %408 = vmatpush1.msra.mxu0 0.0
    %409 = vmatprep.subr.mxu0 0.0
    %410 = vmatpush1.msra.mxu0 0.0
    %411 = vmatprep.subr.mxu0 0.0
    %412 = vmatpush1.msra.mxu0 0.0
    %413 = vmatprep.subr.mxu0 0.0
    %414 = vmatpush1.msra.mxu0 0.0
    %415 = vmatprep.subr.mxu0 0.0
    %416 = vmatpush1.msra.mxu0 0.0
    %417 = vmatprep.subr.mxu0 0.0
    %418 = vmatpush1.msra.mxu0 0.0
    %419 = vmatprep.subr.mxu0 0.0
    %420 = vmatpush1.msra.mxu0 0.0
    %421 = vmatprep.subr.mxu0 0.0
    %422 = vmatpush1.msra.mxu0 0.0
    %423 = vmatprep.subr.mxu0 0.0
    %424 = vmatpush1.msra.mxu0 0.0
    %425 = vmatprep.subr.mxu0 0.0
    %426 = vmatpush1.msra.mxu0 0.0
    %427 = vmatprep.subr.mxu0 0.0
    %428 = vmatpush1.msra.mxu0 0.0
    %429 = vmatprep.mubr.f32.mxu0 0.0
    %430 = vmatmul.mubr.f32.gmra.mrb[0].mxu0 %v273
    %v431 = vpop.f32.mrb[0].mxu0
    %v432 = vadd.f32 0.0, %v431
    %v433 = vpop.f32.mrb[0].mxu0
    %434 = vdwg.mxu0
    %v435 = vadd.f32 %v348, %v432
    %436 = vst.msk [vmem:[#allocation4] sm:$0x1] %vm346, %v435
    // Predicated region
    $region18: #{tpu_custom_call.1} parent=1 // pred_check
      _
    $region19: #{tpu_custom_call.1} parent=1 // pred_check_branch
      %438 = sbr.rel (0) target = $region21
    $region20: #{tpu_custom_call.1} parent=1 // pred_region
      _
    $region21: #{tpu_custom_call.1} parent=1 // pred_fallthru
      _
    // Predicated region
    $region22: #{tpu_custom_call.1} parent=1 // pred_check
      _
    $region23: #{tpu_custom_call.1} parent=1 // pred_check_branch
      %440 = sbr.rel (0) target = $region25
    $region24: #{tpu_custom_call.1} parent=1 // pred_region
      %s442 = ssub.s32 16, 16
      %443 = vsyncadd [#allocation3], %s442
      %s445 = sshll.u32 [#allocation2], 4
      %s446 = int_to_ptr.vmem [resolvable:$true] %s445
      %448 = dma.vmem_to_hbm [thread:$0]  %s446, 16, %s4, [#allocation3]
    $region25: #{tpu_custom_call.1} parent=1 // pred_fallthru
      _
    // Predicated region
    $region26: #{tpu_custom_call.1} parent=1 // pred_check
      _
    $region27: #{tpu_custom_call.1} parent=1 // pred_check_branch
      %450 = sbr.rel (0) target = $region29
    $region28: #{tpu_custom_call.1} parent=1 // pred_region
      %s452 = ssub.s32 16, 16
      %453 = vsyncadd [#allocation5], %s452
      %s455 = sshll.u32 [#allocation4], 4
      %s456 = int_to_ptr.vmem [resolvable:$true] %s455
      %458 = dma.vmem_to_hbm [thread:$0]  %s456, 16, %s5, [#allocation5]
    $region29: #{tpu_custom_call.1} parent=1 // pred_fallthru
      _
    // Predicated region
    $region30: #{tpu_custom_call.1} parent=1 // pred_check
      _
    $region31: #{tpu_custom_call.1} parent=1 // pred_check_branch
      %460 = sbr.rel (0) target = $region33
    $region32: #{tpu_custom_call.1} parent=1 // pred_region
      _
    $region33: #{tpu_custom_call.1} parent=1 // pred_fallthru
      _
    // Predicated region
    $region34: #{tpu_custom_call.1} parent=1 // pred_check
      _
    $region35: #{tpu_custom_call.1} parent=1 // pred_check_branch
      %462 = sbr.rel (0) target = $region37
    $region36: #{tpu_custom_call.1} parent=1 // pred_region
      %463 = dma.done [#allocation3], 16
    $region37: #{tpu_custom_call.1} parent=1 // pred_fallthru
      _
    // Predicated region
    $region38: #{tpu_custom_call.1} parent=1 // pred_check
      _
    $region39: #{tpu_custom_call.1} parent=1 // pred_check_branch
      %465 = sbr.rel (0) target = $region41
    $region40: #{tpu_custom_call.1} parent=1 // pred_region
      %466 = dma.done [#allocation5], 16
    $region41: #{tpu_custom_call.1} parent=1 // pred_fallthru
      _
    %467 = vsyncpa [#allocation3], 1
    %468 = vsyncpa [#allocation5], 1

</llo_original>
